<compile_context>
chip_gen: v5e
topology: v5e:2x2
jax: 0.10.0
libtpu: 0.0.40
codegen_flags: <defaults>
</compile_context>

<pallas_src>
import functools

import jax
import jax.numpy as jnp
from jax.experimental import pallas as pl
from jax.experimental.pallas import tpu as pltpu


def _supcon_kernel(rowlab_ref, collab_ref, anchor_ref, contrast_ref, out_ref,
                   m_sc, s_sc, spl_sc, sp_sc, *,
                   inv_temp, loss_scale, tile_m, tile_n, matmul_dtype):
    i = pl.program_id(0)          # row tile (anchors)          -- "parallel"
    j = pl.program_id(1)          # column tile (contrast cols) -- reduction
    nj = pl.num_programs(1)

    @pl.when(j == 0)
    def _init():
        m_sc[...] = jnp.full_like(m_sc, -jnp.inf)
        s_sc[...] = jnp.zeros_like(s_sc)
        spl_sc[...] = jnp.zeros_like(spl_sc)
        sp_sc[...] = jnp.zeros_like(sp_sc)

    # (anchor / T) @ contrast^T on the MXU.  1/T is folded into the small
    # [tm, D] anchor tile; the contraction is over dim 1 of both operands so no
    # transpose of the [tn, D] contrast tile is materialized.
    a = (anchor_ref[...].astype(jnp.float32) * inv_temp).astype(matmul_dtype)
    c = contrast_ref[...].astype(matmul_dtype)
    logits = jax.lax.dot_general(
        a, c, dimension_numbers=(((1,), (1,)), ((), ())),
        preferred_element_type=jnp.float32)                       # [tm, tn] f32

    # Masks built in-kernel (VPU iota + compares; hides under the MXU).
    grow = i * tile_m + jax.lax.broadcasted_iota(jnp.int32, (tile_m, tile_n), 0)
    gcol = j * tile_n + jax.lax.broadcasted_iota(jnp.int32, (tile_m, tile_n), 1)
    lmask = gcol != grow                                   # self-exclusion mask
    pmask = jnp.logical_and(rowlab_ref[...] == collab_ref[...], lmask)
    lmask_f = lmask.astype(jnp.float32)
    pmask_f = pmask.astype(jnp.float32)

    # Online (flash-style) update.  NOTE: the reference takes the row max over
    # *all* columns (before applying logits_mask), so the raw logits feed max.
    m_prev = m_sc[...]
    m_new = jnp.maximum(m_prev, jnp.max(logits, axis=1, keepdims=True))
    alpha = jnp.exp(m_prev - m_new)         # == 0 on first step (m_prev = -inf)
    s_sc[...] = alpha * s_sc[...] + jnp.sum(
        jnp.exp(logits - m_new) * lmask_f, axis=1, keepdims=True)
    m_sc[...] = m_new
    # sum(pmask*(logits-max-log_denom)) = sum(pmask*logits) - (max+log_denom)*sum(pmask)
    # so these two accumulators need no online rescaling.
    spl_sc[...] += jnp.sum(pmask_f * logits, axis=1, keepdims=True)
    sp_sc[...] += jnp.sum(pmask_f, axis=1, keepdims=True)

    @pl.when(j == nj - 1)
    def _finalize():
        log_denom = jnp.log(s_sc[...] + 1e-6)
        sp = sp_sc[...]
        # NaN if a row has no positives -- same behavior as the PyTorch module.
        mean_log_prob_pos = (spl_sc[...] - (m_sc[...] + log_denom) * sp) / sp
        out_ref[...] = (loss_scale * mean_log_prob_pos).astype(out_ref.dtype)


def _pick_row_tile(b):
    for c in (256, 128, 64, 32, 16, 8):
        if c <= b and b % c == 0:
            return c
    return b                      # block == full array dim is always legal


def _pick_col_tile(m):
    # col-label block is (1, tn): tn must be a multiple of 128 or equal M.
    for c in (1024, 512, 256, 128):
        if c <= m and m % c == 0:
            return c
    return m


def _vmem_limit_bytes(tile_m, tile_n, d, feat_itemsize):
    feats = 2 * (tile_m + tile_n) * d * feat_itemsize      # double-buffered tiles
    labels = 2 * (tile_m + tile_n) * 4
    out = 2 * tile_m * 4
    scratch = 4 * tile_m * 128 * 4                         # (tm,1) padded to lanes
    work = 4 * tile_m * max(tile_n, 128) * 4               # logits / mask tiles
    est = feats + labels + out + scratch + work
    # generous headroom, capped at v7x physical VMEM (64 MiB)
    return int(min(64 * 2**20, max(8 * 2**20, 4 * est)))


def supcon_loss(features, labels=None, mask=None,
                temperature=0.07, contrast_mode='one', base_temperature=0.07,
                matmul_dtype=jnp.bfloat16, tile_m=None, tile_n=None):
    """Pallas implementation of SupConLoss.forward (contrast_mode='one')."""
    if contrast_mode != 'one':
        # TODO(synk): contrast_mode='all' (anchor_count=V) not implemented; module default is 'one'.
        raise NotImplementedError("only contrast_mode='one' is supported")
    if features.ndim < 3:
        raise ValueError('`features` needs to be [bsz, n_views, ...]')
    if features.ndim > 3:
        features = features.reshape(features.shape[0], features.shape[1], -1)
    if labels is not None and mask is not None:
        raise ValueError('Cannot define both `labels` and `mask`')
    if mask is not None:
        # TODO(synk): arbitrary user-provided masks are not rank-1 label compares;
        # would need a [B, B] base-mask input path instead of in-kernel codes.
        raise NotImplementedError('explicit `mask` not supported; pass `labels`')

    B, V, D = features.shape
    M = V * B

    if labels is None:
        codes = jnp.arange(B, dtype=jnp.int32)     # unique codes == identity mask
    else:
        labels = jnp.asarray(labels).reshape(-1)
        if labels.shape[0] != B:
            raise ValueError('Num of labels does not match num of features')
        codes = labels.astype(jnp.int32)

    row_codes = codes.reshape(B, 1)                                    # [B, 1]
    col_codes = jnp.tile(codes, (V,)).reshape(1, M)                    # [1, M]

    # torch.cat(torch.unbind(features, 1), 0): view-major stacking.
    anchor = features[:, 0].astype(matmul_dtype)                       # [B, D]
    contrast = jnp.transpose(features, (1, 0, 2)).reshape(M, D).astype(matmul_dtype)

    tm = tile_m if tile_m is not None else _pick_row_tile(B)
    tn = tile_n if tile_n is not None else _pick_col_tile(M)
    if B % tm or M % tn:
        raise ValueError(f'tile sizes ({tm}, {tn}) must divide (B={B}, M={M})')

    kernel = functools.partial(
        _supcon_kernel,
        inv_temp=float(1.0 / temperature),
        loss_scale=float(-(temperature / base_temperature)),
        tile_m=tm, tile_n=tn, matmul_dtype=matmul_dtype)

    per_anchor = pl.pallas_call(
        kernel,
        out_shape=jax.ShapeDtypeStruct((B, 1), jnp.float32),
        grid_spec=pltpu.PrefetchScalarGridSpec(
            num_scalar_prefetch=0,
            grid=(B // tm, M // tn),
            in_specs=[
                pl.BlockSpec((tm, 1), lambda i, j: (i, 0)),   # row label codes
                pl.BlockSpec((1, tn), lambda i, j: (0, j)),   # col label codes
                pl.BlockSpec((tm, D), lambda i, j: (i, 0)),   # anchor tile
                pl.BlockSpec((tn, D), lambda i, j: (j, 0)),   # contrast tile
            ],
            out_specs=pl.BlockSpec((tm, 1), lambda i, j: (i, 0)),
            scratch_shapes=[
                pltpu.VMEM((tm, 1), jnp.float32),   # running row max
                pltpu.VMEM((tm, 1), jnp.float32),   # rescaled exp-sum
                pltpu.VMEM((tm, 1), jnp.float32),   # sum(pmask * logits)
                pltpu.VMEM((tm, 1), jnp.float32),   # sum(pmask)
            ],
        ),
        compiler_params=pltpu.CompilerParams(
            dimension_semantics=("parallel", "arbitrary"),
            vmem_limit_bytes=_vmem_limit_bytes(
                tm, tn, D, jnp.dtype(matmul_dtype).itemsize)),
    )(row_codes, col_codes, anchor, contrast)

    return jnp.mean(per_anchor)


def _supcon_loss_ref(features, labels=None,
                     temperature=0.07, base_temperature=0.07):
    """Pure-JAX reference mirroring the PyTorch forward (contrast_mode='one')."""
    B, V, D = features.shape
    M = V * B
    if labels is None:
        base_mask = jnp.eye(B, dtype=jnp.float32)
    else:
        labels = jnp.asarray(labels).reshape(-1, 1)
        base_mask = (labels == labels.T).astype(jnp.float32)
    anchor = features[:, 0].astype(jnp.float32)
    contrast = jnp.transpose(features, (1, 0, 2)).reshape(M, D).astype(jnp.float32)
    logits = jnp.matmul(anchor, contrast.T,
                        precision=jax.lax.Precision.HIGHEST) / temperature
    logits = logits - jnp.max(logits, axis=1, keepdims=True)
    pos_mask = jnp.tile(base_mask, (1, V))
    cols = jnp.arange(M)[None, :]
    rows = jnp.arange(B)[:, None]
    lmask = jnp.where(cols == rows, 0.0, 1.0)
    pos_mask = pos_mask * lmask
    exp_logits = jnp.exp(logits) * lmask
    log_prob = logits - jnp.log(exp_logits.sum(1, keepdims=True) + 1e-6)
    mean_log_prob_pos = (pos_mask * log_prob).sum(1) / pos_mask.sum(1)
    loss = -(temperature / base_temperature) * mean_log_prob_pos
    return loss.mean()


if __name__ == "__main__":
    key = jax.random.PRNGKey(0)
    k1, k2 = jax.random.split(key)

    # --- case 1: tiny shape, f32 MXU path (near-exact check vs. reference) ----
    B, V, D = 8, 2, 32
    feats = jax.random.normal(k1, (B, V, D), dtype=jnp.float32)
    feats = feats / jnp.linalg.norm(feats, axis=-1, keepdims=True)
    labels = jax.random.randint(k2, (B,), 0, 3)

    out_f32 = jax.block_until_ready(
        supcon_loss(feats, labels=labels, matmul_dtype=jnp.float32))
    ref = _supcon_loss_ref(feats, labels=labels)
    assert jnp.allclose(out_f32, ref, rtol=1e-3, atol=1e-3), (out_f32, ref)

    # labels=None (identity positive mask) path
    out_eye = jax.block_until_ready(supcon_loss(feats, matmul_dtype=jnp.float32))
    ref_eye = _supcon_loss_ref(feats)
    assert jnp.allclose(out_eye, ref_eye, rtol=1e-3, atol=1e-3), (out_eye, ref_eye)

    # --- case 2: multi-tile grid (2x2) exercising the online-softmax carry ----
    k3, k4 = jax.random.split(k1)
    B2, V2, D2 = 128, 2, 64
    feats2 = jax.random.normal(k3, (B2, V2, D2), dtype=jnp.float32)
    feats2 = feats2 / jnp.linalg.norm(feats2, axis=-1, keepdims=True)
    labels2 = jax.random.randint(k4, (B2,), 0, 8)
    ref2 = _supcon_loss_ref(feats2, labels=labels2)

    # default bf16 MXU path (loose tolerance: bf16 operand quantization)
    out_bf16 = jax.block_until_ready(
        supcon_loss(feats2, labels=labels2, tile_m=64, tile_n=128))
    assert jnp.allclose(out_bf16, ref2, rtol=2e-2, atol=2e-2), (out_bf16, ref2)

    # same shape, f32 path, tighter tolerance (checks the tiled accumulation)
    out2_f32 = jax.block_until_ready(
        supcon_loss(feats2, labels=labels2, tile_m=64, tile_n=128,
                    matmul_dtype=jnp.float32))
    assert jnp.allclose(out2_f32, ref2, rtol=1e-3, atol=1e-3), (out2_f32, ref2)

    print("KERNEL_OK")
</pallas_src>

<mosaic_0001>
module attributes {stable_mosaic.version = 11 : i64} {
  func.func @_supcon_kernel(%arg0: i32, %arg1: i32, %arg2: memref<8x1xi32, #tpu.memory_space<vmem>>, %arg3: memref<1x16xi32, #tpu.memory_space<vmem>>, %arg4: memref<8x32xf32, #tpu.memory_space<vmem>>, %arg5: memref<16x32xf32, #tpu.memory_space<vmem>>, %arg6: memref<8x1xf32, #tpu.memory_space<vmem>>, %arg7: memref<8x1xf32, #tpu.memory_space<vmem>>, %arg8: memref<8x1xf32, #tpu.memory_space<vmem>>, %arg9: memref<8x1xf32, #tpu.memory_space<vmem>>, %arg10: memref<8x1xf32, #tpu.memory_space<vmem>>) attributes {dimension_semantics = [#tpu.dimension_semantics<parallel>, #tpu.dimension_semantics<arbitrary>], iteration_bounds = array<i64: 1, 1>, scalar_prefetch = 0 : i64, scratch_operands = 4 : i64, tpu.core_type = #tpu.core_type<tc>, window_params = [{transform_indices = @transform_0, window_bounds = array<i64: 8, 1>}, {transform_indices = @transform_1, window_bounds = array<i64: 1, 16>}, {transform_indices = @transform_2, window_bounds = array<i64: 8, 32>}, {transform_indices = @transform_3, window_bounds = array<i64: 16, 32>}, {transform_indices = @transform_4, window_bounds = array<i64: 8, 1>}]} {
    %c0_i32 = arith.constant 0 : i32
    %0 = arith.cmpi eq, %arg1, %c0_i32 : i32
    %1 = arith.extui %0 : i1 to i32
    %c0_i32_0 = arith.constant 0 : i32
    %2 = arith.cmpi ne, %1, %c0_i32_0 : i32
    scf.if %2 {
      %cst_31 = arith.constant 0xFF800000 : f32
      %58 = vector.broadcast %cst_31 : f32 to vector<8x1xf32>
      %c0_32 = arith.constant 0 : index
      %c0_33 = arith.constant 0 : index
      %59 = vector.load %arg7[%c0_32, %c0_33] : memref<8x1xf32, #tpu.memory_space<vmem>>, vector<8x1xf32>
      tpu.vector_store %arg7[%c0_32, %c0_33], %58 {strides = array<i32>} : memref<8x1xf32, #tpu.memory_space<vmem>>, vector<8x1xf32>,
      %cst_34 = arith.constant 0.000000e+00 : f32
      %60 = vector.broadcast %cst_34 : f32 to vector<8x1xf32>
      %c0_35 = arith.constant 0 : index
      %c0_36 = arith.constant 0 : index
      %61 = vector.load %arg8[%c0_35, %c0_36] : memref<8x1xf32, #tpu.memory_space<vmem>>, vector<8x1xf32>
      tpu.vector_store %arg8[%c0_35, %c0_36], %60 {strides = array<i32>} : memref<8x1xf32, #tpu.memory_space<vmem>>, vector<8x1xf32>,
      %cst_37 = arith.constant 0.000000e+00 : f32
      %62 = vector.broadcast %cst_37 : f32 to vector<8x1xf32>
      %c0_38 = arith.constant 0 : index
      %c0_39 = arith.constant 0 : index
      %63 = vector.load %arg9[%c0_38, %c0_39] : memref<8x1xf32, #tpu.memory_space<vmem>>, vector<8x1xf32>
      tpu.vector_store %arg9[%c0_38, %c0_39], %62 {strides = array<i32>} : memref<8x1xf32, #tpu.memory_space<vmem>>, vector<8x1xf32>,
      %cst_40 = arith.constant 0.000000e+00 : f32
      %64 = vector.broadcast %cst_40 : f32 to vector<8x1xf32>
      %c0_41 = arith.constant 0 : index
      %c0_42 = arith.constant 0 : index
      %65 = vector.load %arg10[%c0_41, %c0_42] : memref<8x1xf32, #tpu.memory_space<vmem>>, vector<8x1xf32>
      tpu.vector_store %arg10[%c0_41, %c0_42], %64 {strides = array<i32>} : memref<8x1xf32, #tpu.memory_space<vmem>>, vector<8x1xf32>,
    } else {
    }
    %c0 = arith.constant 0 : index
    %c0_1 = arith.constant 0 : index
    %3 = vector.load %arg4[%c0, %c0_1] : memref<8x32xf32, #tpu.memory_space<vmem>>, vector<8x32xf32>
    %cst = arith.constant 14.2857141 : f32
    %4 = vector.broadcast %cst : f32 to vector<8x32xf32>
    %5 = arith.mulf %3, %4 : vector<8x32xf32>
    %c0_2 = arith.constant 0 : index
    %c0_3 = arith.constant 0 : index
    %6 = vector.load %arg5[%c0_2, %c0_3] : memref<16x32xf32, #tpu.memory_space<vmem>>, vector<16x32xf32>
    %cst_4 = arith.constant dense<0.000000e+00> : vector<8x16xf32>
    %7 = tpu.matmul %5, %6, %cst_4 {dimension_numbers = #tpu.dot_dimension_numbers<[1], [1], [0], [0], [0, 0, 1, 0], [], []>} : vector<8x32xf32>, vector<16x32xf32>, vector<8x16xf32> -> vector<8x16xf32>
    %c8_i32 = arith.constant 8 : i32
    %8 = arith.muli %arg0, %c8_i32 : i32
    %9 = tpu.iota {dimensions = array<i32: 0>} : vector<8x16xi32>
    %10 = vector.broadcast %8 : i32 to vector<8x16xi32>
    %11 = arith.addi %10, %9 : vector<8x16xi32>
    %c16_i32 = arith.constant 16 : i32
    %12 = arith.muli %arg1, %c16_i32 : i32
    %13 = tpu.iota {dimensions = array<i32: 1>} : vector<8x16xi32>
    %14 = vector.broadcast %12 : i32 to vector<8x16xi32>
    %15 = arith.addi %14, %13 : vector<8x16xi32>
    %16 = arith.cmpi ne, %15, %11 : vector<8x16xi32>
    %c0_5 = arith.constant 0 : index
    %c0_6 = arith.constant 0 : index
    %17 = vector.load %arg2[%c0_5, %c0_6] : memref<8x1xi32, #tpu.memory_space<vmem>>, vector<8x1xi32>
    %c0_7 = arith.constant 0 : index
    %c0_8 = arith.constant 0 : index
    %18 = vector.load %arg3[%c0_7, %c0_8] : memref<1x16xi32, #tpu.memory_space<vmem>>, vector<1x16xi32>
    %19 = vector.broadcast %17 : vector<8x1xi32> to vector<8x16xi32>
    %20 = vector.broadcast %18 : vector<1x16xi32> to vector<8x16xi32>
    %21 = arith.cmpi eq, %19, %20 : vector<8x16xi32>
    %22 = arith.andi %21, %16 : vector<8x16xi1>
    %23 = arith.extui %16 : vector<8x16xi1> to vector<8x16xi32>
    %24 = arith.sitofp %23 : vector<8x16xi32> to vector<8x16xf32>
    %25 = arith.extui %22 : vector<8x16xi1> to vector<8x16xi32>
    %26 = arith.sitofp %25 : vector<8x16xi32> to vector<8x16xf32>
    %c0_9 = arith.constant 0 : index
    %c0_10 = arith.constant 0 : index
    %27 = vector.load %arg7[%c0_9, %c0_10] : memref<8x1xf32, #tpu.memory_space<vmem>>, vector<8x1xf32>
    %cst_11 = arith.constant dense<0xFF800000> : vector<8xf32>
    %28 = vector.multi_reduction <maximumf>, %7, %cst_11 [1] : vector<8x16xf32> to vector<8xf32>
    %29 = vector.shape_cast %28 : vector<8xf32> to vector<8x1xf32>
    %30 = arith.maximumf %27, %29 : vector<8x1xf32>
    %31 = arith.subf %27, %30 : vector<8x1xf32>
    %32 = math.exp %31 : vector<8x1xf32>
    %c0_12 = arith.constant 0 : index
    %c0_13 = arith.constant 0 : index
    %33 = vector.load %arg8[%c0_12, %c0_13] : memref<8x1xf32, #tpu.memory_space<vmem>>, vector<8x1xf32>
    %34 = arith.mulf %32, %33 : vector<8x1xf32>
    %35 = vector.broadcast %30 : vector<8x1xf32> to vector<8x16xf32>
    %36 = arith.subf %7, %35 : vector<8x16xf32>
    %37 = math.exp %36 : vector<8x16xf32>
    %38 = arith.mulf %37, %24 : vector<8x16xf32>
    %cst_14 = arith.constant dense<0.000000e+00> : vector<8xf32>
    %39 = vector.multi_reduction <add>, %38, %cst_14 [1] : vector<8x16xf32> to vector<8xf32>
    %40 = vector.shape_cast %39 : vector<8xf32> to vector<8x1xf32>
    %41 = arith.addf %34, %40 : vector<8x1xf32>
    %c0_15 = arith.constant 0 : index
    %c0_16 = arith.constant 0 : index
    %42 = vector.load %arg8[%c0_15, %c0_16] : memref<8x1xf32, #tpu.memory_space<vmem>>, vector<8x1xf32>
    tpu.vector_store %arg8[%c0_15, %c0_16], %41 {strides = array<i32>} : memref<8x1xf32, #tpu.memory_space<vmem>>, vector<8x1xf32>,
    %c0_17 = arith.constant 0 : index
    %c0_18 = arith.constant 0 : index
    %43 = vector.load %arg7[%c0_17, %c0_18] : memref<8x1xf32, #tpu.memory_space<vmem>>, vector<8x1xf32>
    tpu.vector_store %arg7[%c0_17, %c0_18], %30 {strides = array<i32>} : memref<8x1xf32, #tpu.memory_space<vmem>>, vector<8x1xf32>,
    %c0_19 = arith.constant 0 : index
    %c0_20 = arith.constant 0 : index
    %44 = vector.load %arg9[%c0_19, %c0_20] : memref<8x1xf32, #tpu.memory_space<vmem>>, vector<8x1xf32>
    %45 = arith.mulf %26, %7 : vector<8x16xf32>
    %cst_21 = arith.constant dense<0.000000e+00> : vector<8xf32>
    %46 = vector.multi_reduction <add>, %45, %cst_21 [1] : vector<8x16xf32> to vector<8xf32>
    %47 = vector.shape_cast %46 : vector<8xf32> to vector<8x1xf32>
    %48 = arith.addf %44, %47 : vector<8x1xf32>
    %c0_22 = arith.constant 0 : index
    %c0_23 = arith.constant 0 : index
    %49 = vector.load %arg9[%c0_22, %c0_23] : memref<8x1xf32, #tpu.memory_space<vmem>>, vector<8x1xf32>
    tpu.vector_store %arg9[%c0_22, %c0_23], %48 {strides = array<i32>} : memref<8x1xf32, #tpu.memory_space<vmem>>, vector<8x1xf32>,
    %c0_24 = arith.constant 0 : index
    %c0_25 = arith.constant 0 : index
    %50 = vector.load %arg10[%c0_24, %c0_25] : memref<8x1xf32, #tpu.memory_space<vmem>>, vector<8x1xf32>
    %cst_26 = arith.constant dense<0.000000e+00> : vector<8xf32>
    %51 = vector.multi_reduction <add>, %26, %cst_26 [1] : vector<8x16xf32> to vector<8xf32>
    %52 = vector.shape_cast %51 : vector<8xf32> to vector<8x1xf32>
    %53 = arith.addf %50, %52 : vector<8x1xf32>
    %c0_27 = arith.constant 0 : index
    %c0_28 = arith.constant 0 : index
    %54 = vector.load %arg10[%c0_27, %c0_28] : memref<8x1xf32, #tpu.memory_space<vmem>>, vector<8x1xf32>
    tpu.vector_store %arg10[%c0_27, %c0_28], %53 {strides = array<i32>} : memref<8x1xf32, #tpu.memory_space<vmem>>, vector<8x1xf32>,
    %c0_i32_29 = arith.constant 0 : i32
    %55 = arith.cmpi eq, %arg1, %c0_i32_29 : i32
    %56 = arith.extui %55 : i1 to i32
    %c0_i32_30 = arith.constant 0 : i32
    %57 = arith.cmpi ne, %56, %c0_i32_30 : i32
    scf.if %57 {
      %c0_31 = arith.constant 0 : index
      %c0_32 = arith.constant 0 : index
      %58 = vector.load %arg8[%c0_31, %c0_32] : memref<8x1xf32, #tpu.memory_space<vmem>>, vector<8x1xf32>
      %cst_33 = arith.constant 9.99999997E-7 : f32
      %59 = vector.broadcast %cst_33 : f32 to vector<8x1xf32>
      %60 = arith.addf %58, %59 : vector<8x1xf32>
      %61 = math.log %60 : vector<8x1xf32>
      %c0_34 = arith.constant 0 : index
      %c0_35 = arith.constant 0 : index
      %62 = vector.load %arg10[%c0_34, %c0_35] : memref<8x1xf32, #tpu.memory_space<vmem>>, vector<8x1xf32>
      %c0_36 = arith.constant 0 : index
      %c0_37 = arith.constant 0 : index
      %63 = vector.load %arg9[%c0_36, %c0_37] : memref<8x1xf32, #tpu.memory_space<vmem>>, vector<8x1xf32>
      %c0_38 = arith.constant 0 : index
      %c0_39 = arith.constant 0 : index
      %64 = vector.load %arg7[%c0_38, %c0_39] : memref<8x1xf32, #tpu.memory_space<vmem>>, vector<8x1xf32>
      %65 = arith.addf %64, %61 : vector<8x1xf32>
      %66 = arith.mulf %65, %62 : vector<8x1xf32>
      %67 = arith.subf %63, %66 : vector<8x1xf32>
      %68 = arith.divf %67, %62 : vector<8x1xf32>
      %cst_40 = arith.constant -1.000000e+00 : f32
      %69 = vector.broadcast %cst_40 : f32 to vector<8x1xf32>
      %70 = arith.mulf %69, %68 : vector<8x1xf32>
      %c0_41 = arith.constant 0 : index
      %c0_42 = arith.constant 0 : index
      %71 = vector.load %arg6[%c0_41, %c0_42] : memref<8x1xf32, #tpu.memory_space<vmem>>, vector<8x1xf32>
      tpu.vector_store %arg6[%c0_41, %c0_42], %70 {strides = array<i32>} : memref<8x1xf32, #tpu.memory_space<vmem>>, vector<8x1xf32>,
    } else {
    }
    return
  }
  func.func @transform_0(%arg0: i32, %arg1: i32) -> (i32, i32) {
    %c0_i32 = arith.constant 0 : i32
    %c0_i32_0 = arith.constant 0 : i32
    return %arg0, %c0_i32 : i32, i32
  }
  func.func @transform_1(%arg0: i32, %arg1: i32) -> (i32, i32) {
    %c0_i32 = arith.constant 0 : i32
    %c0_i32_0 = arith.constant 0 : i32
    return %c0_i32, %arg1 : i32, i32
  }
  func.func @transform_2(%arg0: i32, %arg1: i32) -> (i32, i32) {
    %c0_i32 = arith.constant 0 : i32
    %c0_i32_0 = arith.constant 0 : i32
    return %arg0, %c0_i32 : i32, i32
  }
  func.func @transform_3(%arg0: i32, %arg1: i32) -> (i32, i32) {
    %c0_i32 = arith.constant 0 : i32
    %c0_i32_0 = arith.constant 0 : i32
    return %arg1, %c0_i32 : i32, i32
  }
  func.func @transform_4(%arg0: i32, %arg1: i32) -> (i32, i32) {
    %c0_i32 = arith.constant 0 : i32
    %c0_i32_0 = arith.constant 0 : i32
    return %arg0, %c0_i32 : i32, i32
  }
}

</mosaic_0001>

<llo_original>
// kernel: tpu_custom_call.1
$region0: #{tpu_custom_call.1}
  #allocation0 [shape = 'u32[]', space=smem, size = 0x4, offset = 0x4, fixed_abs, tag = 'smem constant byte address 0x4 - core index']
  #allocation1 [shape = 'u32[72,128]{1,0:T(1,128)}', space=vmem, size = 0x9000, scoped, tag = 'internal scratch']
  #allocation2 [shape = 'f32[8,1]{1,0:T(8,128)}', space=vmem, size = 0x1000, scoped, tag = 'scratch operand']
  #allocation3 [shape = 'f32[8,1]{1,0:T(8,128)}', space=vmem, size = 0x1000, scoped, tag = 'scratch operand']
  #allocation4 [shape = 'f32[8,1]{1,0:T(8,128)}', space=vmem, size = 0x1000, scoped, tag = 'scratch operand']
  #allocation5 [shape = 'f32[8,1]{1,0:T(8,128)}', space=vmem, size = 0x1000, scoped, tag = 'scratch operand']
  %s0 = inlined_call_operand.vmem [shape: s32[8,1], index: 0, kind: input, shape index: {}]
  %s1 = inlined_call_operand.vmem [shape: s32[1,16], index: 1, kind: input, shape index: {}]
  %s2 = inlined_call_operand.vmem [shape: f32[8,32], index: 2, kind: input, shape index: {}]
  %s3 = inlined_call_operand.hbm [shape: f32[16,32], index: 3, kind: input, shape index: {}]
  %s4 = inlined_call_operand.vmem [shape: f32[8,1], index: 4, kind: output, shape index: {}]
  %s5 = sld [smem:[#allocation0]]
  $region38: #{tpu_custom_call.1} parent=0
    _
  %s7 = ssub.s32 1, %s5
  %s8 = scalar_select 0, %s7, %s5
  $region1: #{tpu_custom_call.1} parent=0
    #allocation6 [shape = 'u8[8192]{0}', space=vmem, size = 0x2000, scoped, tag = 'input window, operand 3, single buffered']
    #allocation7 [shape = 's32[1]{0}', space=sflag, size = 0x4, scoped, tag = 'scoped memory for tpu_custom_call.1']
    %9 = vsyncpa [#allocation7], 0
    // Predicated region
    $region2: #{tpu_custom_call.1} parent=1 // pred_check
      _
    $region3: #{tpu_custom_call.1} parent=1 // pred_check_branch
      %11 = sbr.rel (0) target = $region5
    $region4: #{tpu_custom_call.1} parent=1 // pred_region
      _
    $region5: #{tpu_custom_call.1} parent=1 // pred_fallthru
      _
    // Predicated region
    $region6: #{tpu_custom_call.1} parent=1 // pred_check
      _
    $region7: #{tpu_custom_call.1} parent=1 // pred_check_branch
      %13 = sbr.rel (0) target = $region9
    $region8: #{tpu_custom_call.1} parent=1 // pred_region
      _
    $region9: #{tpu_custom_call.1} parent=1 // pred_fallthru
      _
    // Predicated region
    $region10: #{tpu_custom_call.1} parent=1 // pred_check
      _
    $region11: #{tpu_custom_call.1} parent=1 // pred_check_branch
      %15 = sbr.rel (0) target = $region13
    $region12: #{tpu_custom_call.1} parent=1 // pred_region
      _
    $region13: #{tpu_custom_call.1} parent=1 // pred_fallthru
      _
    // Predicated region
    $region14: #{tpu_custom_call.1} parent=1 // pred_check
      _
    $region15: #{tpu_custom_call.1} parent=1 // pred_check_branch
      %17 = sbr.rel (0) target = $region17
    $region16: #{tpu_custom_call.1} parent=1 // pred_region
      %19 = vsyncadd [#allocation7], 0
      %s20 = sshll.u32 %s3, 4
      %s21 = int_to_ptr.hbm [resolvable:$true] %s20
      %s22 = sshll.u32 [#allocation6], 4
      %s23 = int_to_ptr.vmem [resolvable:$true] %s22
      %28 = dma.hbm_to_vmem [thread:$0]  %s21, 256, %s23, [#allocation7], 128, 128, 8
    $region17: #{tpu_custom_call.1} parent=1 // pred_fallthru
      _
    // Predicated region
    $region18: #{tpu_custom_call.1} parent=1 // pred_check
      _
    $region19: #{tpu_custom_call.1} parent=1 // pred_check_branch
      %30 = sbr.rel (0) target = $region21
    $region20: #{tpu_custom_call.1} parent=1 // pred_region
      %32 = dma.done [#allocation7], 256
    $region21: #{tpu_custom_call.1} parent=1 // pred_fallthru
      _
    %p33 = scmp.eq.s32.totalorder 0, 0
    // Predicated region
    $region22: #{tpu_custom_call.1} parent=1 // pred_check
      %p34 = pneg %p33
    $region23: #{tpu_custom_call.1} parent=1 // pred_check_branch
      %36 = sbr.rel (%p34) target = $region25
    $region24: #{tpu_custom_call.1} parent=1 // pred_region
      %vm37 = vcmask 7168
      %38 = vst.msk [vmem:[#allocation2] sm:$0xff] %vm37, -inf
      %39 = vst.msk [vmem:[#allocation3] sm:$0xff] %vm37, 0.0
      %40 = vst.msk [vmem:[#allocation4] sm:$0xff] %vm37, 0.0
      %41 = vst.msk [vmem:[#allocation5] sm:$0xff] %vm37, 0.0
    $region25: #{tpu_custom_call.1} parent=1 // pred_fallthru
      _
    %v42 = vld [vmem:[%s2] sm:$0xff]
    %v43 = vmul.f32 %v42, 14.285714
    %v44 = vld [vmem:[#allocation6] sm:$0xff]
    %v45 = vld [vmem:[#allocation6 + $0x8] sm:$0xff]
    %vm46 = vcmask 261120
    %v48 = vsel %vm46, %v43, 0
    %v51 = vsel %vm46, %v44, 0
    %v54 = vsel %vm46, %v45, 0
    %56 = vmatpush.xpose.msra.mxu0 0.0
    %57 = vmatpush.xpose.msra.mxu0 0.0
    %58 = vmatpush.xpose.msra.mxu0 0.0
    %59 = vmatpush.xpose.msra.mxu0 0.0
    %60 = vmatpush.xpose.msra.mxu0 0.0
    %61 = vmatpush.xpose.msra.mxu0 0.0
    %62 = vmatpush.xpose.msra.mxu0 0.0
    %63 = vmatpush.xpose.msra.mxu0 0.0
    %64 = vmatpush.xpose.msra.mxu0 0.0
    %65 = vmatpush.xpose.msra.mxu0 0.0
    %66 = vmatpush.xpose.msra.mxu0 0.0
    %67 = vmatpush.xpose.msra.mxu0 0.0
    %68 = vmatpush.xpose.msra.mxu0 0.0
    %69 = vmatpush.xpose.msra.mxu0 0.0
    %70 = vmatpush.xpose.msra.mxu0 %v54
    %71 = vmatpush.xpose.msra.mxu0 %v51
    %72 = vmatmul.f32.gmra.mxu0 %v48
    %v73 = vpop.f32.mrf.mxu0
    %v74 = vadd.f32 0.0, %v73
    %75 = vdwg.mxu0
    %s76 = smul.u32 0, 8
    %v77 = vlaneseq
    %v78 = vshrl.u32 %v77, 7
    %v79 = vstv %s76
    %v80 = vadd.s32 %v79, %v78
    %s81 = smul.u32 0, 16
    %v82 = vlaneseq
    %v83 = vand.u32 %v82, 127
    %v84 = vstv %s81
    %v85 = vadd.s32 %v84, %v83
    %vm86 = vcmp.ne.s32.totalorder %v85, %v80
    %v87 = vld [vmem:[%s0] sm:$0xff]
    %v88 = vld [vmem:[%s1] sm:$0x1]
    %89 = vset.pattern.permute.xlu0 0
    %90 = vperm.xlu0 %89, %v87
    %v91 = vpop.permute.xlu0 %90
    %v92 = vperm.slane %v88, 0
    %vm93 = vcmp.eq.s32.totalorder %v91, %v92
    %vm94 = vmand %vm93, %vm86
    %v95 = vsel %vm86, 1, 0
    %v96 = vcvt.s32.f32 %v95
    %v97 = vsel %vm94, 1, 0
    %v98 = vcvt.s32.f32 %v97
    %v99 = vld [vmem:[#allocation2] sm:$0xff]
    %vm100 = vcmask 130048
    %v101 = vsel %vm100, %v74, -inf
    %102 = vmax.xlane.f32.xlu0 %v101
    %v103 = vpop.xlane.xlu0 %102
    %v104 = vmax.f32 %v99, %v103
    %v105 = vsub.f32 %v99, %v104
    %v106 = vmul.f32 %v105, 1.442695
    %v107 = vpow.pop %v106
    %v108 = vld [vmem:[#allocation3] sm:$0xff]
    %v109 = vmul.f32 %v107, %v108
    %111 = vset.pattern.permute.xlu0 0
    %112 = vperm.xlu0 %111, %v104
    %v113 = vpop.permute.xlu0 %112
    %v115 = vsub.f32 %v74, %v113
    %v116 = vmul.f32 %v115, 1.442695
    %v117 = vpow.pop %v116
    %v118 = vmul.f32 %v117, %v96
    %v119 = vsel %vm100, %v118, 0.0
    %120 = vadd.xlane.f32.xlu0 %v119
    %v121 = vpop.xlane.xlu0 %120
    %v122 = vadd.f32 %v109, %v121
    %vm123 = vcmask 7168
    %124 = vst.msk [vmem:[#allocation3] sm:$0xff] %vm123, %v122
    %125 = vst.msk [vmem:[#allocation2] sm:$0xff] %vm123, %v104
    %v126 = vld [vmem:[#allocation4] sm:$0xff]
    %v127 = vmul.f32 %v98, %v74
    %v128 = vsel %vm100, %v127, 0.0
    %129 = vadd.xlane.f32.xlu0 %v128
    %v130 = vpop.xlane.xlu0 %129
    %v131 = vadd.f32 %v126, %v130
    %132 = vst.msk [vmem:[#allocation4] sm:$0xff] %vm123, %v131
    %v133 = vld [vmem:[#allocation5] sm:$0xff]
    %v134 = vsel %vm100, %v98, 0.0
    %135 = vadd.xlane.f32.xlu0 %v134
    %v136 = vpop.xlane.xlu0 %135
    %v137 = vadd.f32 %v133, %v136
    %138 = vst.msk [vmem:[#allocation5] sm:$0xff] %vm123, %v137
    // Predicated region
    $region26: #{tpu_custom_call.1} parent=1 // pred_check
      %p139 = pneg %p33
    $region27: #{tpu_custom_call.1} parent=1 // pred_check_branch
      %141 = sbr.rel (%p139) target = $region29
    $region28: #{tpu_custom_call.1} parent=1 // pred_region
      %v142 = vld [vmem:[#allocation3] sm:$0xff]
      %v143 = vadd.f32 %v142, 1e-06
      %v144 = vlog2.pop %v143
      %v145 = vmul.f32 %v144, 0.6931472
      %v146 = vld [vmem:[#allocation5] sm:$0xff]
      %v147 = vld [vmem:[#allocation4] sm:$0xff]
      %v148 = vld [vmem:[#allocation2] sm:$0xff]
      %v149 = vadd.f32 %v148, %v145
      %v150 = vmul.f32 %v149, %v146
      %v151 = vsub.f32 %v147, %v150
      %v152 = vrcp.pop %v146
      %v153 = vmul.f32 %v146, %v152
      %v154 = vsub.f32 1.0, %v153
      %v155 = vmul.f32 %v152, %v154
      %v156 = vadd.f32 %v152, %v155
      %vm157 = vweird.f32 %v146
      %vm158 = vweird.f32 %v152
      %vm159 = vmor %vm157, %vm158
      %v160 = vsel %vm159, %v152, %v156
      %v161 = vand.u32 2147483647, %v146
      %vm162 = vcmp.eq.f32.partialorder %v161, 8.507059e+37
      %v163 = vand.u32 %v146, 2147483648
      %v164 = vor.u32 1.1754944e-38, %v163
      %v165 = vsel %vm162, %v164, %v160
      %v166 = vmul.f32 %v151, %v165
      %v167 = vmul.f32 %v166, -1.0
      %168 = vst.msk [vmem:[%s4] sm:$0xff] %vm123, %v167
    $region29: #{tpu_custom_call.1} parent=1 // pred_fallthru
      _
    // Predicated region
    $region30: #{tpu_custom_call.1} parent=1 // pred_check
      _
    $region31: #{tpu_custom_call.1} parent=1 // pred_check_branch
      %170 = sbr.rel (0) target = $region33
    $region32: #{tpu_custom_call.1} parent=1 // pred_region
      _
    $region33: #{tpu_custom_call.1} parent=1 // pred_fallthru
      _
    // Predicated region
    $region34: #{tpu_custom_call.1} parent=1 // pred_check
      _
    $region35: #{tpu_custom_call.1} parent=1 // pred_check_branch
      %172 = sbr.rel (0) target = $region37
    $region36: #{tpu_custom_call.1} parent=1 // pred_region
      _
    $region37: #{tpu_custom_call.1} parent=1 // pred_fallthru
      _
    %173 = vsyncpa [#allocation7], 1

</llo_original>
